<compile_context>
chip_gen: v5e
topology: v5e:2x2
jax: 0.10.0
libtpu: 0.0.40
codegen_flags: <defaults>
</compile_context>

<pallas_src>
import functools
from typing import NamedTuple

import jax
import jax.numpy as jnp
from jax.experimental import pallas as pl
from jax.experimental.pallas import tpu as pltpu


LANE = 128
SUBLANE = 8          # f32 sublane height
SEG_ALIGN = 16       # bf16 packed-sublane alignment for parameter-buffer rows
BATCH_ALIGN = 16     # batch tile multiple (covers f32 (8,·) and bf16 (16,·) tiling)


def _round_up(n: int, m: int) -> int:
    return (n + m - 1) // m * m


class Layout(NamedTuple):
    """Static description of the packed parameter buffer (hashable -> jit-static)."""
    input_size: int
    hidden_size: int
    output_size: int
    out_pad: int
    w1_off: int
    b1_off: int
    w2_off: int
    b2_off: int
    w3_off: int
    b3_off: int
    rows: int


def make_layout(input_size=16, hidden_size=256, output_size=4) -> Layout:
    """Row offsets of each parameter inside the single packed (rows, hidden) bf16 buffer.

    Every segment starts at a 16-row boundary (bf16 sublane pair) so in-kernel
    static slices are tile-aligned.  Requires hidden_size % 128 == 0 and
    hidden_size >= round_up(output_size, 128) (true for 256/4).
    """
    out_pad = _round_up(output_size, LANE)                 # 4  -> 128
    assert hidden_size % LANE == 0 and hidden_size >= out_pad

    w1_off = 0
    b1_off = w1_off + _round_up(input_size, SEG_ALIGN)     # 16
    w2_off = b1_off + SEG_ALIGN                            # 32
    b2_off = w2_off + hidden_size                           # 288
    w3_off = b2_off + SEG_ALIGN                            # 304
    b3_off = w3_off + hidden_size                           # 560
    rows = b3_off + SEG_ALIGN                               # 576
    return Layout(input_size, hidden_size, output_size, out_pad,
                  w1_off, b1_off, w2_off, b2_off, w3_off, b3_off, rows)


def pack_params(params, layout: Layout):
    """Pack pre-transposed weights + biases into one (rows, hidden) bf16 buffer."""
    H = layout.hidden_size
    O = layout.output_size
    buf = jnp.zeros((layout.rows, H), jnp.bfloat16)

    def put(b, off, a):
        a = jnp.asarray(a, jnp.bfloat16)
        return b.at[off:off + a.shape[0], :a.shape[1]].set(a)

    buf = put(buf, layout.w1_off, params["w1"])                       # (I, H)
    buf = put(buf, layout.b1_off, params["b1"].reshape(1, H))         # (1, H)
    buf = put(buf, layout.w2_off, params["w2"])                       # (H, H)
    buf = put(buf, layout.b2_off, params["b2"].reshape(1, H))         # (1, H)
    buf = put(buf, layout.w3_off, params["w3"])                       # (H, O)
    buf = put(buf, layout.b3_off, params["b3"].reshape(1, O))         # (1, O)
    return buf


def make_dqn_kernel(layout: Layout):
    I = layout.input_size
    H = layout.hidden_size
    OP = layout.out_pad
    w1o, b1o = layout.w1_off, layout.b1_off
    w2o, b2o = layout.w2_off, layout.b2_off
    w3o, b3o = layout.w3_off, layout.b3_off

    def dqn_kernel(x_ref, p_ref, o_ref):
        # x arrives f32 (tiny, 64 B/row); cast to bf16 only for the MXU.
        x = x_ref[...].astype(jnp.bfloat16)                 # (TB, I)
        w1 = p_ref[w1o:w1o + I, :]                          # (I, H)  bf16
        b1 = p_ref[b1o:b1o + 1, :].astype(jnp.float32)      # (1, H)  f32
        w2 = p_ref[w2o:w2o + H, :]                          # (H, H)  bf16
        b2 = p_ref[b2o:b2o + 1, :].astype(jnp.float32)      # (1, H)  f32
        w3 = p_ref[w3o:w3o + H, 0:OP]                       # (H, OP) bf16, lane-aligned
        b3 = p_ref[b3o:b3o + 1, 0:OP].astype(jnp.float32)   # (1, OP) f32

        # bf16 MXU matmuls with f32 accumulation; bias add + ReLU in f32 (VPU-safe on v5e).
        h1 = jnp.maximum(
            jnp.dot(x, w1, preferred_element_type=jnp.float32) + b1, 0.0)
        h2 = jnp.maximum(
            jnp.dot(h1.astype(jnp.bfloat16), w2,
                    preferred_element_type=jnp.float32) + b2, 0.0)
        o = jnp.dot(h2.astype(jnp.bfloat16), w3,
                    preferred_element_type=jnp.float32) + b3
        o_ref[...] = o.astype(o_ref.dtype)                  # lane-dense (TB, 128) bf16 store

    return dqn_kernel


@functools.partial(jax.jit, static_argnames=("layout", "block_b"))
def dqn_forward(x, packed, layout: Layout, *, block_b=1024):
    """x: (B, input_size) f32; packed: output of pack_params. Returns (B, output_size) f32."""
    B = x.shape[0]
    I = layout.input_size
    H = layout.hidden_size
    O = layout.output_size
    OP = layout.out_pad

    # Batch tile: big enough to amortize per-grid-step overhead, capped at
    # ceil(B/2) (rounded to 16) so there are >=2 grid steps whenever B > 16,
    # letting v7x shard the "parallel" batch axis across its two TensorCores.
    half = _round_up(pl.cdiv(max(B, 1), 2), BATCH_ALIGN)
    TB = _round_up(max(min(block_b, half), 1), BATCH_ALIGN)
    Bp = _round_up(B, TB)
    if Bp != B:
        x = jnp.pad(x, ((0, Bp - B), (0, 0)))
    grid = (Bp // TB,)

    flops = 2 * Bp * (I * H + H * H + H * O)
    bytes_accessed = Bp * I * 4 + Bp * OP * 2 + layout.rows * H * 2

    out = pl.pallas_call(
        make_dqn_kernel(layout),
        out_shape=jax.ShapeDtypeStruct((Bp, OP), jnp.bfloat16),
        grid=grid,
        in_specs=[
            # activations: blocked along batch, double-buffered by the pipeline
            pl.BlockSpec((TB, I), lambda b: (b, 0)),
            # packed weights+biases: constant index_map -> VMEM-resident across tiles
            pl.BlockSpec((layout.rows, H), lambda b: (0, 0)),
        ],
        out_specs=pl.BlockSpec((TB, OP), lambda b: (b, 0)),
        compiler_params=pltpu.CompilerParams(
            dimension_semantics=("parallel",),      # lets v7x split batch over 2 TCs
            vmem_limit_bytes=32 * 1024 * 1024,      # raise v5e's 16 MiB scoped default
        ),
        cost_estimate=pl.CostEstimate(
            flops=flops, transcendentals=0, bytes_accessed=bytes_accessed),
    )(x, packed)

    # TODO(synk): if the consumer is an argmax over Q-values, fuse this slice into it
    # instead of materializing the (B, 4) f32 array.
    return out[:B, :O].astype(jnp.float32)


def init_dqn_params(key, input_size=16, hidden_size=256, output_size=4):
    """Deterministic init mimicking PyTorch nn.Linear default:
    U(-1/sqrt(fan_in), 1/sqrt(fan_in)) for both weight and bias.
    Weights stored pre-transposed as (in_features, out_features), f32 master copy."""
    def linear_init(k, fan_in, fan_out):
        kw, kb = jax.random.split(k)
        bound = 1.0 / jnp.sqrt(jnp.float32(fan_in))
        w = jax.random.uniform(kw, (fan_in, fan_out), jnp.float32, -bound, bound)
        b = jax.random.uniform(kb, (1, fan_out), jnp.float32, -bound, bound)
        return w, b

    k1, k2, k3 = jax.random.split(key, 3)
    w1, b1 = linear_init(k1, input_size, hidden_size)
    w2, b2 = linear_init(k2, hidden_size, hidden_size)
    w3, b3 = linear_init(k3, hidden_size, output_size)
    return {"w1": w1, "b1": b1, "w2": w2, "b2": b2, "w3": w3, "b3": b3}


def dqn_reference(x, params, compute_dtype=jnp.float32):
    """Pure-JAX reference.  compute_dtype=bf16 mirrors the kernel's numerics
    (bf16 operands, f32 accumulation, bf16-stored biases)."""
    def dense(a, w, b):
        y = jnp.dot(a.astype(compute_dtype), w.astype(compute_dtype),
                    preferred_element_type=jnp.float32)
        return y + b.astype(compute_dtype).astype(jnp.float32)

    h1 = jnp.maximum(dense(x, params["w1"], params["b1"]), 0.0)
    h2 = jnp.maximum(dense(h1, params["w2"], params["b2"]), 0.0)
    return dense(h2, params["w3"], params["b3"])


if __name__ == "__main__":
    key = jax.random.PRNGKey(0)
    kx1, kx2, kx3, kp = jax.random.split(key, 4)

    input_size, hidden_size, output_size = 16, 256, 4
    layout = make_layout(input_size, hidden_size, output_size)
    params = init_dqn_params(kp, input_size, hidden_size, output_size)
    packed = pack_params(params, layout)

    def check(x, out, name):
        assert out.shape == (x.shape[0], output_size), name
        assert out.dtype == jnp.float32, name
        ref = dqn_reference(x, params, compute_dtype=jnp.bfloat16)
        assert jnp.allclose(out, ref, atol=1e-2, rtol=1e-2), f"mismatch vs reference ({name})"

    # Case 1: tiny inference batch (single grid step, TB = 16 with 8 padded rows).
    x1 = jax.random.normal(kx1, (8, input_size), jnp.float32)
    out1 = jax.block_until_ready(dqn_forward(x1, packed, layout))
    check(x1, out1, "B=8")

    # Case 2: ragged batch with a small user-supplied block_b (padding + grid=(3,)).
    x2 = jax.random.normal(kx2, (37, input_size), jnp.float32)
    out2 = jax.block_until_ready(dqn_forward(x2, packed, layout, block_b=16))
    check(x2, out2, "B=37 block_b=16")

    # Case 3: default block_b path; TB is capped at ceil(B/2) -> grid=(2,) so both
    # v7x TensorCores get a tile.
    x3 = jax.random.normal(kx3, (300, input_size), jnp.float32)
    out3 = jax.block_until_ready(dqn_forward(x3, packed, layout))
    check(x3, out3, "B=300")

    print("KERNEL_OK")
</pallas_src>

<mosaic_0001>
module attributes {stable_mosaic.version = 11 : i64} {
  func.func @dqn_kernel(%arg0: i32, %arg1: memref<16x16xf32, #tpu.memory_space<vmem>>, %arg2: memref<576x256xbf16, #tpu.memory_space<vmem>>, %arg3: memref<16x128xbf16, #tpu.memory_space<vmem>>) attributes {dimension_semantics = [#tpu.dimension_semantics<parallel>], iteration_bounds = array<i64: 1>, scalar_prefetch = 0 : i64, scratch_operands = 0 : i64, tpu.core_type = #tpu.core_type<tc>, window_params = [{transform_indices = @transform_0, window_bounds = array<i64: 16, 16>}, {pipeline_mode = #tpu.pipeline_mode<synchronous>, transform_indices = @transform_1, window_bounds = array<i64: 576, 256>}, {transform_indices = @transform_2, window_bounds = array<i64: 16, 128>}]} {
    %c0 = arith.constant 0 : index
    %c0_0 = arith.constant 0 : index
    %0 = vector.load %arg1[%c0, %c0_0] : memref<16x16xf32, #tpu.memory_space<vmem>>, vector<16x16xf32>
    %1 = arith.truncf %0 : vector<16x16xf32> to vector<16x16xbf16>
    %c0_1 = arith.constant 0 : index
    %c0_2 = arith.constant 0 : index
    %2 = vector.load %arg2[%c0_1, %c0_2] : memref<576x256xbf16, #tpu.memory_space<vmem>>, vector<16x256xbf16>
    %c16 = arith.constant 16 : index
    %c0_3 = arith.constant 0 : index
    %3 = vector.load %arg2[%c16, %c0_3] : memref<576x256xbf16, #tpu.memory_space<vmem>>, vector<1x256xbf16>
    %4 = arith.extf %3 : vector<1x256xbf16> to vector<1x256xf32>
    %c32 = arith.constant 32 : index
    %c0_4 = arith.constant 0 : index
    %5 = vector.load %arg2[%c32, %c0_4] : memref<576x256xbf16, #tpu.memory_space<vmem>>, vector<256x256xbf16>
    %c288 = arith.constant 288 : index
    %c0_5 = arith.constant 0 : index
    %6 = vector.load %arg2[%c288, %c0_5] : memref<576x256xbf16, #tpu.memory_space<vmem>>, vector<1x256xbf16>
    %7 = arith.extf %6 : vector<1x256xbf16> to vector<1x256xf32>
    %c304 = arith.constant 304 : index
    %c0_6 = arith.constant 0 : index
    %8 = vector.load %arg2[%c304, %c0_6] : memref<576x256xbf16, #tpu.memory_space<vmem>>, vector<256x128xbf16>
    %c560 = arith.constant 560 : index
    %c0_7 = arith.constant 0 : index
    %9 = vector.load %arg2[%c560, %c0_7] : memref<576x256xbf16, #tpu.memory_space<vmem>>, vector<1x128xbf16>
    %10 = arith.extf %9 : vector<1x128xbf16> to vector<1x128xf32>
    %cst = arith.constant dense<0.000000e+00> : vector<16x256xf32>
    %11 = tpu.matmul %1, %2, %cst {dimension_numbers = #tpu.dot_dimension_numbers<[1], [0], [0], [1], [0, 0, 1, 1], [], []>} : vector<16x16xbf16>, vector<16x256xbf16>, vector<16x256xf32> -> vector<16x256xf32>
    %12 = vector.broadcast %4 : vector<1x256xf32> to vector<16x256xf32>
    %13 = arith.addf %11, %12 : vector<16x256xf32>
    %cst_8 = arith.constant 0.000000e+00 : f32
    %14 = vector.broadcast %cst_8 : f32 to vector<16x256xf32>
    %15 = arith.maximumf %13, %14 : vector<16x256xf32>
    %16 = arith.truncf %15 : vector<16x256xf32> to vector<16x256xbf16>
    %cst_9 = arith.constant dense<0.000000e+00> : vector<16x256xf32>
    %17 = tpu.matmul %16, %5, %cst_9 {dimension_numbers = #tpu.dot_dimension_numbers<[1], [0], [0], [1], [0, 0, 1, 1], [], []>} : vector<16x256xbf16>, vector<256x256xbf16>, vector<16x256xf32> -> vector<16x256xf32>
    %18 = vector.broadcast %7 : vector<1x256xf32> to vector<16x256xf32>
    %19 = arith.addf %17, %18 : vector<16x256xf32>
    %cst_10 = arith.constant 0.000000e+00 : f32
    %20 = vector.broadcast %cst_10 : f32 to vector<16x256xf32>
    %21 = arith.maximumf %19, %20 : vector<16x256xf32>
    %22 = arith.truncf %21 : vector<16x256xf32> to vector<16x256xbf16>
    %cst_11 = arith.constant dense<0.000000e+00> : vector<16x128xf32>
    %23 = tpu.matmul %22, %8, %cst_11 {dimension_numbers = #tpu.dot_dimension_numbers<[1], [0], [0], [1], [0, 0, 1, 1], [], []>} : vector<16x256xbf16>, vector<256x128xbf16>, vector<16x128xf32> -> vector<16x128xf32>
    %24 = vector.broadcast %10 : vector<1x128xf32> to vector<16x128xf32>
    %25 = arith.addf %23, %24 : vector<16x128xf32>
    %26 = arith.truncf %25 : vector<16x128xf32> to vector<16x128xbf16>
    %c0_12 = arith.constant 0 : index
    %c0_13 = arith.constant 0 : index
    %27 = vector.load %arg3[%c0_12, %c0_13] : memref<16x128xbf16, #tpu.memory_space<vmem>>, vector<16x128xbf16>
    tpu.vector_store %arg3[%c0_12, %c0_13], %26 {strides = array<i32>} : memref<16x128xbf16, #tpu.memory_space<vmem>>, vector<16x128xbf16>,
    return
  }
  func.func @transform_0(%arg0: i32) -> (i32, i32) {
    %c0_i32 = arith.constant 0 : i32
    %c0_i32_0 = arith.constant 0 : i32
    return %arg0, %c0_i32 : i32, i32
  }
  func.func @transform_1(%arg0: i32) -> (i32, i32) {
    %c0_i32 = arith.constant 0 : i32
    %c0_i32_0 = arith.constant 0 : i32
    %c0_i32_1 = arith.constant 0 : i32
    return %c0_i32, %c0_i32_0 : i32, i32
  }
  func.func @transform_2(%arg0: i32) -> (i32, i32) {
    %c0_i32 = arith.constant 0 : i32
    %c0_i32_0 = arith.constant 0 : i32
    return %arg0, %c0_i32 : i32, i32
  }
}

</mosaic_0001>

<llo_original>
// kernel: dqn_forward.1
$region0: #{dqn_forward.1}
  #allocation0 [shape = 'u32[]', space=smem, size = 0x4, offset = 0x4, fixed_abs, tag = 'smem constant byte address 0x4 - core index']
  #allocation1 [shape = 'u32[72,128]{1,0:T(1,128)}', space=vmem, size = 0x9000, scoped, tag = 'internal scratch']
  %s0 = inlined_call_operand.vmem [shape: f32[16,16], index: 0, kind: input, shape index: {}]
  %s1 = inlined_call_operand.hbm [shape: bf16[576,256], index: 1, kind: input, shape index: {}]
  %s2 = inlined_call_operand.vmem [shape: bf16[16,128], index: 2, kind: output, shape index: {}]
  %s3 = sld [smem:[#allocation0]]
  $region22: #{dqn_forward.1} parent=0
    _
  %s5 = ssub.s32 1, %s3
  %s6 = scalar_select 0, %s5, %s3
  $region1: #{dqn_forward.1} parent=0
    #allocation2 [shape = 'u8[294912]{0}', space=vmem, size = 0x48000, scoped, tag = 'input window, operand 1, single buffered']
    #allocation3 [shape = 's32[1]{0}', space=sflag, size = 0x4, scoped, tag = 'scoped memory for dqn_forward.1']
    %7 = vsyncpa [#allocation3], 0
    // Predicated region
    $region2: #{dqn_forward.1} parent=1 // pred_check
      _
    $region3: #{dqn_forward.1} parent=1 // pred_check_branch
      %9 = sbr.rel (0) target = $region5
    $region4: #{dqn_forward.1} parent=1 // pred_region
      _
    $region5: #{dqn_forward.1} parent=1 // pred_fallthru
      _
    // Predicated region
    $region6: #{dqn_forward.1} parent=1 // pred_check
      _
    $region7: #{dqn_forward.1} parent=1 // pred_check_branch
      %11 = sbr.rel (0) target = $region9
    $region8: #{dqn_forward.1} parent=1 // pred_region
      %13 = vsyncadd [#allocation3], 0
      %s14 = sshll.u32 %s1, 4
      %s15 = int_to_ptr.hbm [resolvable:$true] %s14
      %s16 = sshll.u32 [#allocation2], 4
      %s17 = int_to_ptr.vmem [resolvable:$true] %s16
      %22 = dma.hbm_to_vmem [thread:$0]  %s15, 9216, %s17, [#allocation3], 128, 128, 8
    $region9: #{dqn_forward.1} parent=1 // pred_fallthru
      _
    // Predicated region
    $region10: #{dqn_forward.1} parent=1 // pred_check
      _
    $region11: #{dqn_forward.1} parent=1 // pred_check_branch
      %24 = sbr.rel (0) target = $region13
    $region12: #{dqn_forward.1} parent=1 // pred_region
      %26 = dma.done [#allocation3], 9216
    $region13: #{dqn_forward.1} parent=1 // pred_fallthru
      _
    %v28 = vld [vmem:[%s0] sm:$0xff]
    %v29 = vld [vmem:[%s0 + $0x8] sm:$0xff]
    %v30 = vpack.c.bf16 %v29, %v28
    %v31 = vld [vmem:[#allocation2] sm:$0xff]
    %v32 = vld [vmem:[#allocation2 + $0x8] sm:$0xff]
    %v33 = vld [vmem:[#allocation2 + $0x10] sm:$0x11]
    %v34 = vunpack.c.l.bf16 %v33
    %v35 = vunpack.c.h.bf16 %v33
    %v36 = vld [vmem:[#allocation2 + $0x20] sm:$0xff]
    %v37 = vld [vmem:[#allocation2 + $0x28] sm:$0xff]
    %v38 = vld [vmem:[#allocation2 + $0x30] sm:$0xff]
    %v39 = vld [vmem:[#allocation2 + $0x38] sm:$0xff]
    %v40 = vld [vmem:[#allocation2 + $0x40] sm:$0xff]
    %v41 = vld [vmem:[#allocation2 + $0x48] sm:$0xff]
    %v42 = vld [vmem:[#allocation2 + $0x50] sm:$0xff]
    %v43 = vld [vmem:[#allocation2 + $0x58] sm:$0xff]
    %v44 = vld [vmem:[#allocation2 + $0x60] sm:$0xff]
    %v45 = vld [vmem:[#allocation2 + $0x68] sm:$0xff]
    %v46 = vld [vmem:[#allocation2 + $0x70] sm:$0xff]
    %v47 = vld [vmem:[#allocation2 + $0x78] sm:$0xff]
    %v48 = vld [vmem:[#allocation2 + $0x80] sm:$0xff]
    %v49 = vld [vmem:[#allocation2 + $0x88] sm:$0xff]
    %v50 = vld [vmem:[#allocation2 + $0x90] sm:$0xff]
    %v51 = vld [vmem:[#allocation2 + $0x98] sm:$0xff]
    %v52 = vld [vmem:[#allocation2 + $0xa0] sm:$0xff]
    %v53 = vld [vmem:[#allocation2 + $0xa8] sm:$0xff]
    %v54 = vld [vmem:[#allocation2 + $0xb0] sm:$0xff]
    %v55 = vld [vmem:[#allocation2 + $0xb8] sm:$0xff]
    %v56 = vld [vmem:[#allocation2 + $0xc0] sm:$0xff]
    %v57 = vld [vmem:[#allocation2 + $0xc8] sm:$0xff]
    %v58 = vld [vmem:[#allocation2 + $0xd0] sm:$0xff]
    %v59 = vld [vmem:[#allocation2 + $0xd8] sm:$0xff]
    %v60 = vld [vmem:[#allocation2 + $0xe0] sm:$0xff]
    %v61 = vld [vmem:[#allocation2 + $0xe8] sm:$0xff]
    %v62 = vld [vmem:[#allocation2 + $0xf0] sm:$0xff]
    %v63 = vld [vmem:[#allocation2 + $0xf8] sm:$0xff]
    %v64 = vld [vmem:[#allocation2 + $0x100] sm:$0xff]
    %v65 = vld [vmem:[#allocation2 + $0x108] sm:$0xff]
    %v66 = vld [vmem:[#allocation2 + $0x110] sm:$0xff]
    %v67 = vld [vmem:[#allocation2 + $0x118] sm:$0xff]
    %v68 = vld [vmem:[#allocation2 + $0x120] sm:$0x11]
    %v69 = vunpack.c.l.bf16 %v68
    %v70 = vunpack.c.h.bf16 %v68
    %v71 = vld [vmem:[#allocation2 + $0x130] sm:$0xf]
    %v72 = vld [vmem:[#allocation2 + $0x138] sm:$0xf]
    %v73 = vld [vmem:[#allocation2 + $0x140] sm:$0xf]
    %v74 = vld [vmem:[#allocation2 + $0x148] sm:$0xf]
    %v75 = vld [vmem:[#allocation2 + $0x150] sm:$0xf]
    %v76 = vld [vmem:[#allocation2 + $0x158] sm:$0xf]
    %v77 = vld [vmem:[#allocation2 + $0x160] sm:$0xf]
    %v78 = vld [vmem:[#allocation2 + $0x168] sm:$0xf]
    %v79 = vld [vmem:[#allocation2 + $0x170] sm:$0xf]
    %v80 = vld [vmem:[#allocation2 + $0x178] sm:$0xf]
    %v81 = vld [vmem:[#allocation2 + $0x180] sm:$0xf]
    %v82 = vld [vmem:[#allocation2 + $0x188] sm:$0xf]
    %v83 = vld [vmem:[#allocation2 + $0x190] sm:$0xf]
    %v84 = vld [vmem:[#allocation2 + $0x198] sm:$0xf]
    %v85 = vld [vmem:[#allocation2 + $0x1a0] sm:$0xf]
    %v86 = vld [vmem:[#allocation2 + $0x1a8] sm:$0xf]
    %v87 = vld [vmem:[#allocation2 + $0x1b0] sm:$0xf]
    %v88 = vld [vmem:[#allocation2 + $0x1b8] sm:$0xf]
    %v89 = vld [vmem:[#allocation2 + $0x1c0] sm:$0xf]
    %v90 = vld [vmem:[#allocation2 + $0x1c8] sm:$0xf]
    %v91 = vld [vmem:[#allocation2 + $0x1d0] sm:$0xf]
    %v92 = vld [vmem:[#allocation2 + $0x1d8] sm:$0xf]
    %v93 = vld [vmem:[#allocation2 + $0x1e0] sm:$0xf]
    %v94 = vld [vmem:[#allocation2 + $0x1e8] sm:$0xf]
    %v95 = vld [vmem:[#allocation2 + $0x1f0] sm:$0xf]
    %v96 = vld [vmem:[#allocation2 + $0x1f8] sm:$0xf]
    %v97 = vld [vmem:[#allocation2 + $0x200] sm:$0xf]
    %v98 = vld [vmem:[#allocation2 + $0x208] sm:$0xf]
    %v99 = vld [vmem:[#allocation2 + $0x210] sm:$0xf]
    %v100 = vld [vmem:[#allocation2 + $0x218] sm:$0xf]
    %v101 = vld [vmem:[#allocation2 + $0x220] sm:$0xf]
    %v102 = vld [vmem:[#allocation2 + $0x228] sm:$0xf]
    %v103 = vld [vmem:[#allocation2 + $0x230] sm:$0x1]
    %v104 = vunpack.c.l.bf16 %v103
    %v105 = vperm.slane %v34, 0
    %v106 = vperm.slane %v35, 0
    %v109 = vunpack.c.l.b16 %v31
    %v110 = vunpack.c.h.b16 %v31
    %v111 = vunpack.c.l.b16 %v32
    %v112 = vunpack.c.h.b16 %v32
    %v113 = vpack.c.b16 %v111, %v109
    %v114 = vpack.c.b16 %v112, %v110
    %vm117 = vcmask 130048
    %v119 = vsel %vm117, %v30, 0
    %121 = vmatpush.bf16.msra.mxu0 0
    %122 = vmatpush.bf16.msra.mxu0 0
    %123 = vmatpush.bf16.msra.mxu0 0
    %124 = vmatpush.bf16.msra.mxu0 0
    %125 = vmatpush.bf16.msra.mxu0 0
    %126 = vmatpush.bf16.msra.mxu0 0
    %127 = vmatpush.bf16.msra.mxu0 0
    %128 = vmatpush.bf16.msra.mxu0 %v113
    %129 = vmatmul.bf16.gmra.mxu0 %v119
    %v130 = vpop.f32.mrf.mxu0
    %v131 = vadd.f32 %v105, %v130
    %v132 = vpop.f32.mrf.mxu0
    %v133 = vadd.f32 %v105, %v132
    %134 = vdwg.mxu0
    %135 = vmatpush.bf16.msra.mxu0 0
    %136 = vmatpush.bf16.msra.mxu0 0
    %137 = vmatpush.bf16.msra.mxu0 0
    %138 = vmatpush.bf16.msra.mxu0 0
    %139 = vmatpush.bf16.msra.mxu0 0
    %140 = vmatpush.bf16.msra.mxu0 0
    %141 = vmatpush.bf16.msra.mxu0 0
    %142 = vmatpush.bf16.msra.mxu0 %v114
    %143 = vmatmul.bf16.gmra.mxu0 %v119
    %v144 = vpop.f32.mrf.mxu0
    %v145 = vadd.f32 %v106, %v144
    %v146 = vpop.f32.mrf.mxu0
    %v147 = vadd.f32 %v106, %v146
    %148 = vdwg.mxu0
    %v149 = vmax.f32 %v131, 0.0
    %v150 = vmax.f32 %v145, 0.0
    %v151 = vmax.f32 %v133, 0.0
    %v152 = vmax.f32 %v147, 0.0
    %v153 = vpack.c.bf16 %v151, %v149
    %v154 = vpack.c.bf16 %v152, %v150
    %v155 = vperm.slane %v69, 0
    %v156 = vperm.slane %v70, 0
    %v189 = vunpack.c.l.b16 %v36
    %v190 = vunpack.c.h.b16 %v36
    %v191 = vunpack.c.l.b16 %v37
    %v192 = vunpack.c.h.b16 %v37
    %v193 = vunpack.c.l.b16 %v38
    %v194 = vunpack.c.h.b16 %v38
    %v195 = vunpack.c.l.b16 %v39
    %v196 = vunpack.c.h.b16 %v39
    %v197 = vunpack.c.l.b16 %v40
    %v198 = vunpack.c.h.b16 %v40
    %v199 = vunpack.c.l.b16 %v41
    %v200 = vunpack.c.h.b16 %v41
    %v201 = vunpack.c.l.b16 %v42
    %v202 = vunpack.c.h.b16 %v42
    %v203 = vunpack.c.l.b16 %v43
    %v204 = vunpack.c.h.b16 %v43
    %v205 = vunpack.c.l.b16 %v44
    %v206 = vunpack.c.h.b16 %v44
    %v207 = vunpack.c.l.b16 %v45
    %v208 = vunpack.c.h.b16 %v45
    %v209 = vunpack.c.l.b16 %v46
    %v210 = vunpack.c.h.b16 %v46
    %v211 = vunpack.c.l.b16 %v47
    %v212 = vunpack.c.h.b16 %v47
    %v213 = vunpack.c.l.b16 %v48
    %v214 = vunpack.c.h.b16 %v48
    %v215 = vunpack.c.l.b16 %v49
    %v216 = vunpack.c.h.b16 %v49
    %v217 = vunpack.c.l.b16 %v50
    %v218 = vunpack.c.h.b16 %v50
    %v219 = vunpack.c.l.b16 %v51
    %v220 = vunpack.c.h.b16 %v51
    %v221 = vunpack.c.l.b16 %v52
    %v222 = vunpack.c.h.b16 %v52
    %v223 = vunpack.c.l.b16 %v53
    %v224 = vunpack.c.h.b16 %v53
    %v225 = vunpack.c.l.b16 %v54
    %v226 = vunpack.c.h.b16 %v54
    %v227 = vunpack.c.l.b16 %v55
    %v228 = vunpack.c.h.b16 %v55
    %v229 = vunpack.c.l.b16 %v56
    %v230 = vunpack.c.h.b16 %v56
    %v231 = vunpack.c.l.b16 %v57
    %v232 = vunpack.c.h.b16 %v57
    %v233 = vunpack.c.l.b16 %v58
    %v234 = vunpack.c.h.b16 %v58
    %v235 = vunpack.c.l.b16 %v59
    %v236 = vunpack.c.h.b16 %v59
    %v237 = vunpack.c.l.b16 %v60
    %v238 = vunpack.c.h.b16 %v60
    %v239 = vunpack.c.l.b16 %v61
    %v240 = vunpack.c.h.b16 %v61
    %v241 = vunpack.c.l.b16 %v62
    %v242 = vunpack.c.h.b16 %v62
    %v243 = vunpack.c.l.b16 %v63
    %v244 = vunpack.c.h.b16 %v63
    %v245 = vunpack.c.l.b16 %v64
    %v246 = vunpack.c.h.b16 %v64
    %v247 = vunpack.c.l.b16 %v65
    %v248 = vunpack.c.h.b16 %v65
    %v249 = vunpack.c.l.b16 %v66
    %v250 = vunpack.c.h.b16 %v66
    %v251 = vunpack.c.l.b16 %v67
    %v252 = vunpack.c.h.b16 %v67
    %v253 = vpack.c.b16 %v191, %v189
    %v254 = vpack.c.b16 %v192, %v190
    %v255 = vpack.c.b16 %v195, %v193
    %v256 = vpack.c.b16 %v196, %v194
    %v257 = vpack.c.b16 %v199, %v197
    %v258 = vpack.c.b16 %v200, %v198
    %v259 = vpack.c.b16 %v203, %v201
    %v260 = vpack.c.b16 %v204, %v202
    %v261 = vpack.c.b16 %v207, %v205
    %v262 = vpack.c.b16 %v208, %v206
    %v263 = vpack.c.b16 %v211, %v209
    %v264 = vpack.c.b16 %v212, %v210
    %v265 = vpack.c.b16 %v215, %v213
    %v266 = vpack.c.b16 %v216, %v214
    %v267 = vpack.c.b16 %v219, %v217
    %v268 = vpack.c.b16 %v220, %v218
    %v269 = vpack.c.b16 %v223, %v221
    %v270 = vpack.c.b16 %v224, %v222
    %v271 = vpack.c.b16 %v227, %v225
    %v272 = vpack.c.b16 %v228, %v226
    %v273 = vpack.c.b16 %v231, %v229
    %v274 = vpack.c.b16 %v232, %v230
    %v275 = vpack.c.b16 %v235, %v233
    %v276 = vpack.c.b16 %v236, %v234
    %v277 = vpack.c.b16 %v239, %v237
    %v278 = vpack.c.b16 %v240, %v238
    %v279 = vpack.c.b16 %v243, %v241
    %v280 = vpack.c.b16 %v244, %v242
    %v281 = vpack.c.b16 %v247, %v245
    %v282 = vpack.c.b16 %v248, %v246
    %v283 = vpack.c.b16 %v251, %v249
    %v284 = vpack.c.b16 %v252, %v250
    %317 = vmatpush.bf16.msra.mxu0 %v267
    %318 = vmatpush.bf16.msra.mxu0 %v265
    %319 = vmatpush.bf16.msra.mxu0 %v263
    %320 = vmatpush.bf16.msra.mxu0 %v261
    %321 = vmatpush.bf16.msra.mxu0 %v259
    %322 = vmatpush.bf16.msra.mxu0 %v257
    %323 = vmatpush.bf16.msra.mxu0 %v255
    %324 = vmatpush.bf16.msra.mxu0 %v253
    %325 = vmatmul.bf16.gmra.mxu0 %v153
    %v326 = vpop.f32.mrf.mxu0
    %v327 = vadd.f32 %v155, %v326
    %v328 = vpop.f32.mrf.mxu0
    %v329 = vadd.f32 %v155, %v328
    %330 = vdwg.mxu0
    %331 = vmatpush.bf16.msra.mxu0 %v283
    %332 = vmatpush.bf16.msra.mxu0 %v281
    %333 = vmatpush.bf16.msra.mxu0 %v279
    %334 = vmatpush.bf16.msra.mxu0 %v277
    %335 = vmatpush.bf16.msra.mxu0 %v275
    %336 = vmatpush.bf16.msra.mxu0 %v273
    %337 = vmatpush.bf16.msra.mxu0 %v271
    %338 = vmatpush.bf16.msra.mxu0 %v269
    %339 = vmatmul.bf16.gmra.mxu0 %v154
    %v340 = vpop.f32.mrf.mxu0
    %v341 = vadd.f32 %v327, %v340
    %v342 = vpop.f32.mrf.mxu0
    %v343 = vadd.f32 %v329, %v342
    %344 = vdwg.mxu0
    %345 = vmatpush.bf16.msra.mxu0 %v268
    %346 = vmatpush.bf16.msra.mxu0 %v266
    %347 = vmatpush.bf16.msra.mxu0 %v264
    %348 = vmatpush.bf16.msra.mxu0 %v262
    %349 = vmatpush.bf16.msra.mxu0 %v260
    %350 = vmatpush.bf16.msra.mxu0 %v258
    %351 = vmatpush.bf16.msra.mxu0 %v256
    %352 = vmatpush.bf16.msra.mxu0 %v254
    %353 = vmatmul.bf16.gmra.mxu0 %v153
    %v354 = vpop.f32.mrf.mxu0
    %v355 = vadd.f32 %v156, %v354
    %v356 = vpop.f32.mrf.mxu0
    %v357 = vadd.f32 %v156, %v356
    %358 = vdwg.mxu0
    %359 = vmatpush.bf16.msra.mxu0 %v284
    %360 = vmatpush.bf16.msra.mxu0 %v282
    %361 = vmatpush.bf16.msra.mxu0 %v280
    %362 = vmatpush.bf16.msra.mxu0 %v278
    %363 = vmatpush.bf16.msra.mxu0 %v276
    %364 = vmatpush.bf16.msra.mxu0 %v274
    %365 = vmatpush.bf16.msra.mxu0 %v272
    %366 = vmatpush.bf16.msra.mxu0 %v270
    %367 = vmatmul.bf16.gmra.mxu0 %v154
    %v368 = vpop.f32.mrf.mxu0
    %v369 = vadd.f32 %v355, %v368
    %v370 = vpop.f32.mrf.mxu0
    %v371 = vadd.f32 %v357, %v370
    %372 = vdwg.mxu0
    %v373 = vmax.f32 %v341, 0.0
    %v374 = vmax.f32 %v369, 0.0
    %v375 = vmax.f32 %v343, 0.0
    %v376 = vmax.f32 %v371, 0.0
    %v377 = vpack.c.bf16 %v375, %v373
    %v378 = vpack.c.bf16 %v376, %v374
    %v379 = vperm.slane %v104, 0
    %v412 = vunpack.c.l.b16 %v71
    %v413 = vunpack.c.l.b16 %v72
    %v414 = vunpack.c.l.b16 %v73
    %v415 = vunpack.c.l.b16 %v74
    %v416 = vunpack.c.l.b16 %v75
    %v417 = vunpack.c.l.b16 %v76
    %v418 = vunpack.c.l.b16 %v77
    %v419 = vunpack.c.l.b16 %v78
    %v420 = vunpack.c.l.b16 %v79
    %v421 = vunpack.c.l.b16 %v80
    %v422 = vunpack.c.l.b16 %v81
    %v423 = vunpack.c.l.b16 %v82
    %v424 = vunpack.c.l.b16 %v83
    %v425 = vunpack.c.l.b16 %v84
    %v426 = vunpack.c.l.b16 %v85
    %v427 = vunpack.c.l.b16 %v86
    %v428 = vunpack.c.l.b16 %v87
    %v429 = vunpack.c.l.b16 %v88
    %v430 = vunpack.c.l.b16 %v89
    %v431 = vunpack.c.l.b16 %v90
    %v432 = vunpack.c.l.b16 %v91
    %v433 = vunpack.c.l.b16 %v92
    %v434 = vunpack.c.l.b16 %v93
    %v435 = vunpack.c.l.b16 %v94
    %v436 = vunpack.c.l.b16 %v95
    %v437 = vunpack.c.l.b16 %v96
    %v438 = vunpack.c.l.b16 %v97
    %v439 = vunpack.c.l.b16 %v98
    %v440 = vunpack.c.l.b16 %v99
    %v441 = vunpack.c.l.b16 %v100
    %v442 = vunpack.c.l.b16 %v101
    %v443 = vunpack.c.l.b16 %v102
    %v444 = vpack.c.b16 %v413, %v412
    %v445 = vpack.c.b16 %v415, %v414
    %v446 = vpack.c.b16 %v417, %v416
    %v447 = vpack.c.b16 %v419, %v418
    %v448 = vpack.c.b16 %v421, %v420
    %v449 = vpack.c.b16 %v423, %v422
    %v450 = vpack.c.b16 %v425, %v424
    %v451 = vpack.c.b16 %v427, %v426
    %v452 = vpack.c.b16 %v429, %v428
    %v453 = vpack.c.b16 %v431, %v430
    %v454 = vpack.c.b16 %v433, %v432
    %v455 = vpack.c.b16 %v435, %v434
    %v456 = vpack.c.b16 %v437, %v436
    %v457 = vpack.c.b16 %v439, %v438
    %v458 = vpack.c.b16 %v441, %v440
    %v459 = vpack.c.b16 %v443, %v442
    %476 = vmatpush.bf16.msra.mxu0 %v451
    %477 = vmatpush.bf16.msra.mxu0 %v450
    %478 = vmatpush.bf16.msra.mxu0 %v449
    %479 = vmatpush.bf16.msra.mxu0 %v448
    %480 = vmatpush.bf16.msra.mxu0 %v447
    %481 = vmatpush.bf16.msra.mxu0 %v446
    %482 = vmatpush.bf16.msra.mxu0 %v445
    %483 = vmatpush.bf16.msra.mxu0 %v444
    %484 = vmatmul.bf16.gmra.mxu0 %v377
    %v485 = vpop.f32.mrf.mxu0
    %v486 = vadd.f32 %v379, %v485
    %v487 = vpop.f32.mrf.mxu0
    %v488 = vadd.f32 %v379, %v487
    %489 = vdwg.mxu0
    %490 = vmatpush.bf16.msra.mxu0 %v459
    %491 = vmatpush.bf16.msra.mxu0 %v458
    %492 = vmatpush.bf16.msra.mxu0 %v457
    %493 = vmatpush.bf16.msra.mxu0 %v456
    %494 = vmatpush.bf16.msra.mxu0 %v455
    %495 = vmatpush.bf16.msra.mxu0 %v454
    %496 = vmatpush.bf16.msra.mxu0 %v453
    %497 = vmatpush.bf16.msra.mxu0 %v452
    %498 = vmatmul.bf16.gmra.mxu0 %v378
    %v499 = vpop.f32.mrf.mxu0
    %v500 = vadd.f32 %v486, %v499
    %v501 = vpop.f32.mrf.mxu0
    %v502 = vadd.f32 %v488, %v501
    %503 = vdwg.mxu0
    %v504 = vpack.c.bf16 %v500, %v500
    %v505 = vpack.c.bf16 %v502, %v502
    %506 = vst [vmem:[%s2] sm:$0xf] %v504
    %507 = vst [vmem:[%s2 + $0x4] sm:$0xf] %v505
    // Predicated region
    $region14: #{dqn_forward.1} parent=1 // pred_check
      _
    $region15: #{dqn_forward.1} parent=1 // pred_check_branch
      %509 = sbr.rel (0) target = $region17
    $region16: #{dqn_forward.1} parent=1 // pred_region
      _
    $region17: #{dqn_forward.1} parent=1 // pred_fallthru
      _
    // Predicated region
    $region18: #{dqn_forward.1} parent=1 // pred_check
      _
    $region19: #{dqn_forward.1} parent=1 // pred_check_branch
      %511 = sbr.rel (0) target = $region21
    $region20: #{dqn_forward.1} parent=1 // pred_region
      _
    $region21: #{dqn_forward.1} parent=1 // pred_fallthru
      _
    %512 = vsyncpa [#allocation3], 1

</llo_original>
